<compile_context>
chip_gen: v5e
topology: v5e:2x2
jax: 0.10.0
libtpu: 0.0.40
codegen_flags: <defaults>
</compile_context>

<pallas_src>
import jax
import jax.numpy as jnp
from jax.experimental import pallas as pl
from jax.experimental.pallas import tpu as pltpu

_LANE = 128
_SUBLANE = 8
_VMEM_BUDGET = 40 * 1024 * 1024      # working-set target (fits v7x's 64 MiB physical)
_VMEM_LIMIT = 64 * 1024 * 1024       # scoped VMEM limit handed to Mosaic


def _round_up(n, m):
    return ((n + m - 1) // m) * m


# --------------------------------------------------------------------------
# Kernel
# --------------------------------------------------------------------------
def _autoencoder_kernel(
    x_ref,
    w1_ref, b1_ref,
    w2_ref, b2_ref,
    w3_ref, b3_ref,
    w4_ref, b4_ref,
    w5_ref, b5_ref,
    w6_ref, b6_ref,
    recon_ref, enc_ref,
):
    # Activations / elementwise math stay in f32; only MXU operands are cast
    # to the (possibly bf16) weight dtype.  Accumulation is always f32.
    def linear(h_f32, w_ref, b_ref):
        return (
            jnp.dot(h_f32.astype(w_ref.dtype), w_ref[...],
                    preferred_element_type=jnp.float32)
            + b_ref[...]                      # (1, out) f32, broadcasts over rows
        )

    x = x_ref[...].astype(jnp.float32)

    # Encoder: Linear->ReLU x3
    h = jax.nn.relu(linear(x, w1_ref, b1_ref))
    h = jax.nn.relu(linear(h, w2_ref, b2_ref))
    encoded = jax.nn.relu(linear(h, w3_ref, b3_ref))

    # Decoder: Linear->ReLU x2, Linear->Sigmoid
    d = jax.nn.relu(linear(encoded, w4_ref, b4_ref))
    d = jax.nn.relu(linear(d, w5_ref, b5_ref))
    recon = jax.nn.sigmoid(linear(d, w6_ref, b6_ref))

    enc_ref[...] = encoded.astype(enc_ref.dtype)
    recon_ref[...] = recon.astype(recon_ref.dtype)


# --------------------------------------------------------------------------
# Parameter init / preparation (done once, outside the forward)
# --------------------------------------------------------------------------
def init_autoencoder_params(key, input_size, encoding_size=10, dtype=jnp.float32):
    """PyTorch-style uniform(+-1/sqrt(fan_in)) init. Weights stored (in, out)."""
    dims = [
        (input_size, 128), (128, 64), (64, encoding_size),   # encoder
        (encoding_size, 64), (64, 128), (128, input_size),   # decoder
    ]
    params = []
    for (fan_in, fan_out) in dims:
        key, kw, kb = jax.random.split(key, 3)
        bound = 1.0 / (fan_in ** 0.5)
        w = jax.random.uniform(kw, (fan_in, fan_out), dtype, -bound, bound)
        b = jax.random.uniform(kb, (fan_out,), dtype, -bound, bound)
        params.append((w, b))
    return params


def prepare_autoencoder_params(params, *, matmul_dtype=jnp.bfloat16):
    """Pad weights to 128-multiples and cast them to `matmul_dtype` ONCE.

    Biases are kept f32 (elementwise add stays f32 in the kernel) and stored
    as (1, out) 2-D arrays (lane-aligned, no explicit broadcast in-kernel).
    Returns (flat_param_list, meta).
    """
    input_size = params[0][0].shape[0]
    encoding_size = params[2][0].shape[1]

    F_pad = _round_up(input_size, _LANE)
    H1 = _round_up(128, _LANE)                 # 128
    H2 = _round_up(64, _LANE)                  # 64  -> 128
    ENC_pad = _round_up(encoding_size, _LANE)  # 10  -> 128

    dims_pad = [
        (F_pad, H1), (H1, H2), (H2, ENC_pad),      # encoder
        (ENC_pad, H2), (H2, H1), (H1, F_pad),      # decoder
    ]
    flat = []
    for (w, b), (ip, op) in zip(params, dims_pad):
        wp = jnp.pad(w, ((0, ip - w.shape[0]), (0, op - w.shape[1])))
        bp = jnp.pad(b, (0, op - b.shape[0]))
        flat.append(wp.astype(matmul_dtype))
        flat.append(bp.astype(jnp.float32).reshape(1, op))

    meta = dict(input_size=input_size, encoding_size=encoding_size,
                F_pad=F_pad, ENC_pad=ENC_pad, H1=H1, H2=H2)
    return flat, meta


# --------------------------------------------------------------------------
# Forward wrapper
# --------------------------------------------------------------------------
def autoencoder_forward(x, prepared, *, max_tile_b=1024, min_grid_steps=2):
    """Full autoencoder forward pass in one batch-tiled Pallas kernel.

    x:        (B, input_size)
    prepared: output of prepare_autoencoder_params(params)
    returns:  (x_reconstructed (B, input_size), encoded (B, encoding_size))
    """
    flat, meta = prepared
    B, F = x.shape
    assert F == meta["input_size"], "input feature dim mismatch"
    F_pad, ENC_pad = meta["F_pad"], meta["ENC_pad"]
    H1, H2 = meta["H1"], meta["H2"]
    enc = meta["encoding_size"]

    x_bytes = jnp.dtype(x.dtype).itemsize
    w_bytes = sum(int(a.size) * jnp.dtype(a.dtype).itemsize for a in flat)

    # ---- adaptive batch tile: >=min_grid_steps steps, bounded by VMEM budget ----
    tile_b = min(max_tile_b, max(_SUBLANE,
                                 _round_up(pl.cdiv(B, min_grid_steps), _SUBLANE)))

    def vmem_est(t):
        # x tile (double-buffered) + recon tile + encoded tile (double-buffered,
        # f32 outputs) + single-buffered weights/biases.
        return (2 * t * F_pad * x_bytes
                + 2 * t * F_pad * 4
                + 2 * t * ENC_pad * 4
                + w_bytes)

    while tile_b > _SUBLANE and vmem_est(tile_b) > _VMEM_BUDGET:
        tile_b = max(_SUBLANE, _round_up(tile_b // 2, _SUBLANE))

    grid_steps = pl.cdiv(B, tile_b)
    B_pad = grid_steps * tile_b              # over-pad is < one tile
    grid = (grid_steps,)

    # ---- conditional padding of x (skip the extra HBM round trip when aligned) ----
    if B_pad != B or F_pad != F:
        x_p = jnp.pad(x, ((0, B_pad - B), (0, F_pad - F)))
    else:
        x_p = x

    x_spec = pl.BlockSpec((tile_b, F_pad), lambda i: (i, 0))
    # weights / biases: constant index_map, single-buffered, VMEM-resident.
    wb_specs = [
        pl.BlockSpec(a.shape, lambda i: (0, 0), pipeline_mode=pl.Buffered(1))
        for a in flat
    ]
    out_specs = (
        pl.BlockSpec((tile_b, F_pad), lambda i: (i, 0)),
        pl.BlockSpec((tile_b, ENC_pad), lambda i: (i, 0)),
    )
    out_shape = (
        jax.ShapeDtypeStruct((B_pad, F_pad), x.dtype),
        jax.ShapeDtypeStruct((B_pad, ENC_pad), x.dtype),
    )

    # ---- advisory cost estimate ----
    flops = 2 * B_pad * (F_pad * H1 + H1 * H2 + H2 * ENC_pad
                         + ENC_pad * H2 + H2 * H1 + H1 * F_pad)
    bytes_accessed = (x_bytes * B_pad * F_pad            # x in
                      + 4 * B_pad * (F_pad + ENC_pad)    # recon + encoded out
                      + w_bytes)
    transcendentals = B_pad * F_pad                      # final sigmoid (exp)

    recon_p, enc_p = pl.pallas_call(
        _autoencoder_kernel,
        grid=grid,
        in_specs=[x_spec] + wb_specs,
        out_specs=out_specs,
        out_shape=out_shape,
        compiler_params=pltpu.CompilerParams(
            dimension_semantics=("parallel",),
            vmem_limit_bytes=_VMEM_LIMIT,
        ),
        cost_estimate=pl.CostEstimate(
            flops=flops,
            transcendentals=transcendentals,
            bytes_accessed=bytes_accessed,
        ),
    )(x_p, *flat)

    # slice padded lanes / rows back to the true shapes (no-op copies avoided
    # when already aligned)
    recon = recon_p if (B_pad == B and F_pad == F) else recon_p[:B, :F]
    encoded = enc_p[:B, :enc] if (B_pad != B or ENC_pad != enc) else enc_p
    return recon, encoded
    # TODO(synk): emit `encoded` as bf16 (or drop it) when downstream allows, to cut
    # its 10->128-lane padded HBM writeback.


# --------------------------------------------------------------------------
# Pure-JAX reference (for correctness checks)
# --------------------------------------------------------------------------
def _reference_forward(x, params):
    h = x
    encoded = None
    for i, (w, b) in enumerate(params):
        h = h @ w + b
        h = jax.nn.relu(h) if i < 5 else jax.nn.sigmoid(h)
        if i == 2:
            encoded = h
    return h, encoded


if __name__ == "__main__":
    key = jax.random.PRNGKey(0)
    k_x, k_x2, k_p = jax.random.split(key, 3)

    B, input_size, encoding_size = 8, 32, 10
    x = jax.random.uniform(k_x, (B, input_size), jnp.float32)
    params = init_autoencoder_params(k_p, input_size, encoding_size)
    ref_recon, ref_encoded = _reference_forward(x, params)

    # --- f32 matmul path: bit-faithful to the reference ---
    prepared_f32 = prepare_autoencoder_params(params, matmul_dtype=jnp.float32)
    recon_f32, enc_f32 = autoencoder_forward(x, prepared_f32)
    recon_f32 = jax.block_until_ready(recon_f32)
    enc_f32 = jax.block_until_ready(enc_f32)
    assert recon_f32.shape == (B, input_size) and enc_f32.shape == (B, encoding_size)
    assert jnp.allclose(recon_f32, ref_recon, atol=1e-5, rtol=1e-5)
    assert jnp.allclose(enc_f32, ref_encoded, atol=1e-5, rtol=1e-5)

    # --- bf16 matmul path (default, perf): looser tolerance ---
    prepared_bf16 = prepare_autoencoder_params(params)   # matmul_dtype=bf16
    recon_bf, enc_bf = autoencoder_forward(x, prepared_bf16)
    recon_bf = jax.block_until_ready(recon_bf)
    enc_bf = jax.block_until_ready(enc_bf)
    assert jnp.allclose(recon_bf, ref_recon, atol=3e-2, rtol=3e-2)
    assert jnp.allclose(enc_bf, ref_encoded, atol=3e-2, rtol=3e-2)

    # --- non-aligned batch: exercises multi-step grid + tail padding ---
    B2 = 24
    x2 = jax.random.uniform(k_x2, (B2, input_size), jnp.float32)
    ref_recon2, ref_encoded2 = _reference_forward(x2, params)
    recon2, enc2 = autoencoder_forward(x2, prepared_f32)
    recon2 = jax.block_until_ready(recon2)
    enc2 = jax.block_until_ready(enc2)
    assert recon2.shape == (B2, input_size) and enc2.shape == (B2, encoding_size)
    assert jnp.allclose(recon2, ref_recon2, atol=1e-5, rtol=1e-5)
    assert jnp.allclose(enc2, ref_encoded2, atol=1e-5, rtol=1e-5)

    print("KERNEL_OK")
</pallas_src>

<mosaic_0001>
module attributes {stable_mosaic.version = 11 : i64} {
  func.func @_autoencoder_kernel(%arg0: i32, %arg1: memref<8x128xf32, #tpu.memory_space<vmem>>, %arg2: memref<128x128xf32, #tpu.memory_space<vmem>>, %arg3: memref<1x128xf32, #tpu.memory_space<vmem>>, %arg4: memref<128x128xf32, #tpu.memory_space<vmem>>, %arg5: memref<1x128xf32, #tpu.memory_space<vmem>>, %arg6: memref<128x128xf32, #tpu.memory_space<vmem>>, %arg7: memref<1x128xf32, #tpu.memory_space<vmem>>, %arg8: memref<128x128xf32, #tpu.memory_space<vmem>>, %arg9: memref<1x128xf32, #tpu.memory_space<vmem>>, %arg10: memref<128x128xf32, #tpu.memory_space<vmem>>, %arg11: memref<1x128xf32, #tpu.memory_space<vmem>>, %arg12: memref<128x128xf32, #tpu.memory_space<vmem>>, %arg13: memref<1x128xf32, #tpu.memory_space<vmem>>, %arg14: memref<8x128xf32, #tpu.memory_space<vmem>>, %arg15: memref<8x128xf32, #tpu.memory_space<vmem>>) attributes {dimension_semantics = [#tpu.dimension_semantics<parallel>], iteration_bounds = array<i64: 1>, scalar_prefetch = 0 : i64, scratch_operands = 0 : i64, tpu.core_type = #tpu.core_type<tc>, window_params = [{transform_indices = @transform_0, window_bounds = array<i64: 8, 128>}, {pipeline_mode = #tpu.pipeline_mode<synchronous>, transform_indices = @transform_1, window_bounds = array<i64: 128, 128>}, {pipeline_mode = #tpu.pipeline_mode<synchronous>, transform_indices = @transform_2, window_bounds = array<i64: 1, 128>}, {pipeline_mode = #tpu.pipeline_mode<synchronous>, transform_indices = @transform_3, window_bounds = array<i64: 128, 128>}, {pipeline_mode = #tpu.pipeline_mode<synchronous>, transform_indices = @transform_4, window_bounds = array<i64: 1, 128>}, {pipeline_mode = #tpu.pipeline_mode<synchronous>, transform_indices = @transform_5, window_bounds = array<i64: 128, 128>}, {pipeline_mode = #tpu.pipeline_mode<synchronous>, transform_indices = @transform_6, window_bounds = array<i64: 1, 128>}, {pipeline_mode = #tpu.pipeline_mode<synchronous>, transform_indices = @transform_7, window_bounds = array<i64: 128, 128>}, {pipeline_mode = #tpu.pipeline_mode<synchronous>, transform_indices = @transform_8, window_bounds = array<i64: 1, 128>}, {pipeline_mode = #tpu.pipeline_mode<synchronous>, transform_indices = @transform_9, window_bounds = array<i64: 128, 128>}, {pipeline_mode = #tpu.pipeline_mode<synchronous>, transform_indices = @transform_10, window_bounds = array<i64: 1, 128>}, {pipeline_mode = #tpu.pipeline_mode<synchronous>, transform_indices = @transform_11, window_bounds = array<i64: 128, 128>}, {pipeline_mode = #tpu.pipeline_mode<synchronous>, transform_indices = @transform_12, window_bounds = array<i64: 1, 128>}, {transform_indices = @transform_13, window_bounds = array<i64: 8, 128>}, {transform_indices = @transform_14, window_bounds = array<i64: 8, 128>}]} {
    %c0 = arith.constant 0 : index
    %c0_0 = arith.constant 0 : index
    %0 = vector.load %arg1[%c0, %c0_0] : memref<8x128xf32, #tpu.memory_space<vmem>>, vector<8x128xf32>
    %c0_1 = arith.constant 0 : index
    %c0_2 = arith.constant 0 : index
    %1 = vector.load %arg2[%c0_1, %c0_2] : memref<128x128xf32, #tpu.memory_space<vmem>>, vector<128x128xf32>
    %cst = arith.constant dense<0.000000e+00> : vector<8x128xf32>
    %2 = tpu.matmul %0, %1, %cst {dimension_numbers = #tpu.dot_dimension_numbers<[1], [0], [0], [1], [0, 0, 1, 1], [], []>} : vector<8x128xf32>, vector<128x128xf32>, vector<8x128xf32> -> vector<8x128xf32>
    %c0_3 = arith.constant 0 : index
    %c0_4 = arith.constant 0 : index
    %3 = vector.load %arg3[%c0_3, %c0_4] : memref<1x128xf32, #tpu.memory_space<vmem>>, vector<1x128xf32>
    %4 = vector.broadcast %3 : vector<1x128xf32> to vector<8x128xf32>
    %5 = arith.addf %2, %4 : vector<8x128xf32>
    %cst_5 = arith.constant 0.000000e+00 : f32
    %6 = vector.broadcast %cst_5 : f32 to vector<8x128xf32>
    %7 = arith.maximumf %5, %6 : vector<8x128xf32>
    %c0_6 = arith.constant 0 : index
    %c0_7 = arith.constant 0 : index
    %8 = vector.load %arg4[%c0_6, %c0_7] : memref<128x128xf32, #tpu.memory_space<vmem>>, vector<128x128xf32>
    %cst_8 = arith.constant dense<0.000000e+00> : vector<8x128xf32>
    %9 = tpu.matmul %7, %8, %cst_8 {dimension_numbers = #tpu.dot_dimension_numbers<[1], [0], [0], [1], [0, 0, 1, 1], [], []>} : vector<8x128xf32>, vector<128x128xf32>, vector<8x128xf32> -> vector<8x128xf32>
    %c0_9 = arith.constant 0 : index
    %c0_10 = arith.constant 0 : index
    %10 = vector.load %arg5[%c0_9, %c0_10] : memref<1x128xf32, #tpu.memory_space<vmem>>, vector<1x128xf32>
    %11 = vector.broadcast %10 : vector<1x128xf32> to vector<8x128xf32>
    %12 = arith.addf %9, %11 : vector<8x128xf32>
    %cst_11 = arith.constant 0.000000e+00 : f32
    %13 = vector.broadcast %cst_11 : f32 to vector<8x128xf32>
    %14 = arith.maximumf %12, %13 : vector<8x128xf32>
    %c0_12 = arith.constant 0 : index
    %c0_13 = arith.constant 0 : index
    %15 = vector.load %arg6[%c0_12, %c0_13] : memref<128x128xf32, #tpu.memory_space<vmem>>, vector<128x128xf32>
    %cst_14 = arith.constant dense<0.000000e+00> : vector<8x128xf32>
    %16 = tpu.matmul %14, %15, %cst_14 {dimension_numbers = #tpu.dot_dimension_numbers<[1], [0], [0], [1], [0, 0, 1, 1], [], []>} : vector<8x128xf32>, vector<128x128xf32>, vector<8x128xf32> -> vector<8x128xf32>
    %c0_15 = arith.constant 0 : index
    %c0_16 = arith.constant 0 : index
    %17 = vector.load %arg7[%c0_15, %c0_16] : memref<1x128xf32, #tpu.memory_space<vmem>>, vector<1x128xf32>
    %18 = vector.broadcast %17 : vector<1x128xf32> to vector<8x128xf32>
    %19 = arith.addf %16, %18 : vector<8x128xf32>
    %cst_17 = arith.constant 0.000000e+00 : f32
    %20 = vector.broadcast %cst_17 : f32 to vector<8x128xf32>
    %21 = arith.maximumf %19, %20 : vector<8x128xf32>
    %c0_18 = arith.constant 0 : index
    %c0_19 = arith.constant 0 : index
    %22 = vector.load %arg8[%c0_18, %c0_19] : memref<128x128xf32, #tpu.memory_space<vmem>>, vector<128x128xf32>
    %cst_20 = arith.constant dense<0.000000e+00> : vector<8x128xf32>
    %23 = tpu.matmul %21, %22, %cst_20 {dimension_numbers = #tpu.dot_dimension_numbers<[1], [0], [0], [1], [0, 0, 1, 1], [], []>} : vector<8x128xf32>, vector<128x128xf32>, vector<8x128xf32> -> vector<8x128xf32>
    %c0_21 = arith.constant 0 : index
    %c0_22 = arith.constant 0 : index
    %24 = vector.load %arg9[%c0_21, %c0_22] : memref<1x128xf32, #tpu.memory_space<vmem>>, vector<1x128xf32>
    %25 = vector.broadcast %24 : vector<1x128xf32> to vector<8x128xf32>
    %26 = arith.addf %23, %25 : vector<8x128xf32>
    %cst_23 = arith.constant 0.000000e+00 : f32
    %27 = vector.broadcast %cst_23 : f32 to vector<8x128xf32>
    %28 = arith.maximumf %26, %27 : vector<8x128xf32>
    %c0_24 = arith.constant 0 : index
    %c0_25 = arith.constant 0 : index
    %29 = vector.load %arg10[%c0_24, %c0_25] : memref<128x128xf32, #tpu.memory_space<vmem>>, vector<128x128xf32>
    %cst_26 = arith.constant dense<0.000000e+00> : vector<8x128xf32>
    %30 = tpu.matmul %28, %29, %cst_26 {dimension_numbers = #tpu.dot_dimension_numbers<[1], [0], [0], [1], [0, 0, 1, 1], [], []>} : vector<8x128xf32>, vector<128x128xf32>, vector<8x128xf32> -> vector<8x128xf32>
    %c0_27 = arith.constant 0 : index
    %c0_28 = arith.constant 0 : index
    %31 = vector.load %arg11[%c0_27, %c0_28] : memref<1x128xf32, #tpu.memory_space<vmem>>, vector<1x128xf32>
    %32 = vector.broadcast %31 : vector<1x128xf32> to vector<8x128xf32>
    %33 = arith.addf %30, %32 : vector<8x128xf32>
    %cst_29 = arith.constant 0.000000e+00 : f32
    %34 = vector.broadcast %cst_29 : f32 to vector<8x128xf32>
    %35 = arith.maximumf %33, %34 : vector<8x128xf32>
    %c0_30 = arith.constant 0 : index
    %c0_31 = arith.constant 0 : index
    %36 = vector.load %arg12[%c0_30, %c0_31] : memref<128x128xf32, #tpu.memory_space<vmem>>, vector<128x128xf32>
    %cst_32 = arith.constant dense<0.000000e+00> : vector<8x128xf32>
    %37 = tpu.matmul %35, %36, %cst_32 {dimension_numbers = #tpu.dot_dimension_numbers<[1], [0], [0], [1], [0, 0, 1, 1], [], []>} : vector<8x128xf32>, vector<128x128xf32>, vector<8x128xf32> -> vector<8x128xf32>
    %c0_33 = arith.constant 0 : index
    %c0_34 = arith.constant 0 : index
    %38 = vector.load %arg13[%c0_33, %c0_34] : memref<1x128xf32, #tpu.memory_space<vmem>>, vector<1x128xf32>
    %39 = vector.broadcast %38 : vector<1x128xf32> to vector<8x128xf32>
    %40 = arith.addf %37, %39 : vector<8x128xf32>
    %41 = arith.negf %40 : vector<8x128xf32>
    %42 = math.exp %41 : vector<8x128xf32>
    %cst_35 = arith.constant 1.000000e+00 : f32
    %43 = vector.broadcast %cst_35 : f32 to vector<8x128xf32>
    %44 = arith.addf %43, %42 : vector<8x128xf32>
    %45 = arith.divf %43, %44 : vector<8x128xf32>
    %c0_36 = arith.constant 0 : index
    %c0_37 = arith.constant 0 : index
    %46 = vector.load %arg15[%c0_36, %c0_37] : memref<8x128xf32, #tpu.memory_space<vmem>>, vector<8x128xf32>
    tpu.vector_store %arg15[%c0_36, %c0_37], %21 {strides = array<i32>} : memref<8x128xf32, #tpu.memory_space<vmem>>, vector<8x128xf32>,
    %c0_38 = arith.constant 0 : index
    %c0_39 = arith.constant 0 : index
    %47 = vector.load %arg14[%c0_38, %c0_39] : memref<8x128xf32, #tpu.memory_space<vmem>>, vector<8x128xf32>
    tpu.vector_store %arg14[%c0_38, %c0_39], %45 {strides = array<i32>} : memref<8x128xf32, #tpu.memory_space<vmem>>, vector<8x128xf32>,
    return
  }
  func.func @transform_0(%arg0: i32) -> (i32, i32) {
    %c0_i32 = arith.constant 0 : i32
    %c0_i32_0 = arith.constant 0 : i32
    return %arg0, %c0_i32 : i32, i32
  }
  func.func @transform_1(%arg0: i32) -> (i32, i32) {
    %c0_i32 = arith.constant 0 : i32
    %c0_i32_0 = arith.constant 0 : i32
    %c0_i32_1 = arith.constant 0 : i32
    return %c0_i32, %c0_i32_0 : i32, i32
  }
  func.func @transform_2(%arg0: i32) -> (i32, i32) {
    %c0_i32 = arith.constant 0 : i32
    %c0_i32_0 = arith.constant 0 : i32
    %c0_i32_1 = arith.constant 0 : i32
    return %c0_i32, %c0_i32_0 : i32, i32
  }
  func.func @transform_3(%arg0: i32) -> (i32, i32) {
    %c0_i32 = arith.constant 0 : i32
    %c0_i32_0 = arith.constant 0 : i32
    %c0_i32_1 = arith.constant 0 : i32
    return %c0_i32, %c0_i32_0 : i32, i32
  }
  func.func @transform_4(%arg0: i32) -> (i32, i32) {
    %c0_i32 = arith.constant 0 : i32
    %c0_i32_0 = arith.constant 0 : i32
    %c0_i32_1 = arith.constant 0 : i32
    return %c0_i32, %c0_i32_0 : i32, i32
  }
  func.func @transform_5(%arg0: i32) -> (i32, i32) {
    %c0_i32 = arith.constant 0 : i32
    %c0_i32_0 = arith.constant 0 : i32
    %c0_i32_1 = arith.constant 0 : i32
    return %c0_i32, %c0_i32_0 : i32, i32
  }
  func.func @transform_6(%arg0: i32) -> (i32, i32) {
    %c0_i32 = arith.constant 0 : i32
    %c0_i32_0 = arith.constant 0 : i32
    %c0_i32_1 = arith.constant 0 : i32
    return %c0_i32, %c0_i32_0 : i32, i32
  }
  func.func @transform_7(%arg0: i32) -> (i32, i32) {
    %c0_i32 = arith.constant 0 : i32
    %c0_i32_0 = arith.constant 0 : i32
    %c0_i32_1 = arith.constant 0 : i32
    return %c0_i32, %c0_i32_0 : i32, i32
  }
  func.func @transform_8(%arg0: i32) -> (i32, i32) {
    %c0_i32 = arith.constant 0 : i32
    %c0_i32_0 = arith.constant 0 : i32
    %c0_i32_1 = arith.constant 0 : i32
    return %c0_i32, %c0_i32_0 : i32, i32
  }
  func.func @transform_9(%arg0: i32) -> (i32, i32) {
    %c0_i32 = arith.constant 0 : i32
    %c0_i32_0 = arith.constant 0 : i32
    %c0_i32_1 = arith.constant 0 : i32
    return %c0_i32, %c0_i32_0 : i32, i32
  }
  func.func @transform_10(%arg0: i32) -> (i32, i32) {
    %c0_i32 = arith.constant 0 : i32
    %c0_i32_0 = arith.constant 0 : i32
    %c0_i32_1 = arith.constant 0 : i32
    return %c0_i32, %c0_i32_0 : i32, i32
  }
  func.func @transform_11(%arg0: i32) -> (i32, i32) {
    %c0_i32 = arith.constant 0 : i32
    %c0_i32_0 = arith.constant 0 : i32
    %c0_i32_1 = arith.constant 0 : i32
    return %c0_i32, %c0_i32_0 : i32, i32
  }
  func.func @transform_12(%arg0: i32) -> (i32, i32) {
    %c0_i32 = arith.constant 0 : i32
    %c0_i32_0 = arith.constant 0 : i32
    %c0_i32_1 = arith.constant 0 : i32
    return %c0_i32, %c0_i32_0 : i32, i32
  }
  func.func @transform_13(%arg0: i32) -> (i32, i32) {
    %c0_i32 = arith.constant 0 : i32
    %c0_i32_0 = arith.constant 0 : i32
    return %arg0, %c0_i32 : i32, i32
  }
  func.func @transform_14(%arg0: i32) -> (i32, i32) {
    %c0_i32 = arith.constant 0 : i32
    %c0_i32_0 = arith.constant 0 : i32
    return %arg0, %c0_i32 : i32, i32
  }
}

</mosaic_0001>

<llo_original>
// kernel: tpu_custom_call.1
$region0: #{tpu_custom_call.1}
  #allocation0 [shape = 'u32[]', space=smem, size = 0x4, offset = 0x4, fixed_abs, tag = 'smem constant byte address 0x4 - core index']
  #allocation1 [shape = 'u32[72,128]{1,0:T(1,128)}', space=vmem, size = 0x9000, scoped, tag = 'internal scratch']
  %s0 = inlined_call_operand.hbm [shape: f32[8,128], index: 0, kind: input, shape index: {}]
  %s1 = inlined_call_operand.hbm [shape: f32[128,128], index: 1, kind: input, shape index: {}]
  %s2 = inlined_call_operand.vmem [shape: f32[1,128], index: 2, kind: input, shape index: {}]
  %s3 = inlined_call_operand.hbm [shape: f32[128,128], index: 3, kind: input, shape index: {}]
  %s4 = inlined_call_operand.vmem [shape: f32[1,128], index: 4, kind: input, shape index: {}]
  %s5 = inlined_call_operand.hbm [shape: f32[128,128], index: 5, kind: input, shape index: {}]
  %s6 = inlined_call_operand.vmem [shape: f32[1,128], index: 6, kind: input, shape index: {}]
  %s7 = inlined_call_operand.hbm [shape: f32[128,128], index: 7, kind: input, shape index: {}]
  %s8 = inlined_call_operand.vmem [shape: f32[1,128], index: 8, kind: input, shape index: {}]
  %s9 = inlined_call_operand.hbm [shape: f32[128,128], index: 9, kind: input, shape index: {}]
  %s10 = inlined_call_operand.vmem [shape: f32[1,128], index: 10, kind: input, shape index: {}]
  %s11 = inlined_call_operand.hbm [shape: f32[128,128], index: 11, kind: input, shape index: {}]
  %s12 = inlined_call_operand.vmem [shape: f32[1,128], index: 12, kind: input, shape index: {}]
  %s13 = inlined_call_operand.hbm [shape: f32[8,128], index: 13, kind: output, shape index: {0}]
  %s14 = inlined_call_operand.hbm [shape: f32[8,128], index: 14, kind: output, shape index: {1}]
  %15 = xla_tuple %s13, %s14
  %s16 = sld [smem:[#allocation0]]
  $region98: #{tpu_custom_call.1} parent=0
    _
  %s18 = ssub.s32 1, %s16
  %s19 = scalar_select 0, %s18, %s16
  $region1: #{tpu_custom_call.1} parent=0
    #allocation2 [shape = 'u8[4096]{0}', space=vmem, size = 0x1000, scoped, tag = 'input window, operand 0, single buffered']
    #allocation3 [shape = 's32[1]{0}', space=sflag, size = 0x4, scoped, tag = 'scoped memory for tpu_custom_call.1']
    #allocation4 [shape = 's32[1]{0}', space=sflag, size = 0x4, scoped, tag = 'scoped memory for tpu_custom_call.1']
    #allocation5 [shape = 'u8[65536]{0}', space=vmem, size = 0x10000, scoped, tag = 'input window, operand 1, single buffered']
    #allocation6 [shape = 's32[1]{0}', space=sflag, size = 0x4, scoped, tag = 'scoped memory for tpu_custom_call.1']
    #allocation7 [shape = 'u8[65536]{0}', space=vmem, size = 0x10000, scoped, tag = 'input window, operand 3, single buffered']
    #allocation8 [shape = 'u8[65536]{0}', space=vmem, size = 0x10000, scoped, tag = 'input window, operand 5, single buffered']
    #allocation9 [shape = 's32[1]{0}', space=sflag, size = 0x4, scoped, tag = 'scoped memory for tpu_custom_call.1']
    #allocation10 [shape = 'u8[65536]{0}', space=vmem, size = 0x10000, scoped, tag = 'input window, operand 7, single buffered']
    #allocation11 [shape = 'u8[65536]{0}', space=vmem, size = 0x10000, scoped, tag = 'input window, operand 9, single buffered']
    #allocation12 [shape = 's32[1]{0}', space=sflag, size = 0x4, scoped, tag = 'scoped memory for tpu_custom_call.1']
    #allocation13 [shape = 'u8[65536]{0}', space=vmem, size = 0x10000, scoped, tag = 'input window, operand 11, single buffered']
    #allocation14 [shape = 'u8[4096]{0}', space=vmem, size = 0x1000, scoped, tag = 'output window, operand 0, single buffered']
    #allocation15 [shape = 'u8[4096]{0}', space=vmem, size = 0x1000, scoped, tag = 'output window, operand 1, single buffered']
    #allocation16 [shape = 's32[1]{0}', space=sflag, size = 0x4, scoped, tag = 'scoped memory for tpu_custom_call.1']
    %20 = vsyncpa [#allocation3], 0
    %21 = vsyncpa [#allocation6], 0
    %22 = vsyncpa [#allocation9], 0
    %23 = vsyncpa [#allocation12], 0
    %24 = vsyncpa [#allocation4], 0
    %25 = vsyncpa [#allocation16], 0
    // Predicated region
    $region2: #{tpu_custom_call.1} parent=1 // pred_check
      _
    $region3: #{tpu_custom_call.1} parent=1 // pred_check_branch
      %27 = sbr.rel (0) target = $region5
    $region4: #{tpu_custom_call.1} parent=1 // pred_region
      %29 = vsyncadd [#allocation3], 0
      %s31 = sshll.u32 %s0, 4
      %s32 = int_to_ptr.hbm [resolvable:$true] %s31
      %s33 = sshll.u32 [#allocation2], 4
      %s34 = int_to_ptr.vmem [resolvable:$true] %s33
      %36 = dma.hbm_to_vmem [thread:$0]  %s32, 128, %s34, [#allocation3]
    $region5: #{tpu_custom_call.1} parent=1 // pred_fallthru
      _
    // Predicated region
    $region6: #{tpu_custom_call.1} parent=1 // pred_check
      _
    $region7: #{tpu_custom_call.1} parent=1 // pred_check_branch
      %38 = sbr.rel (0) target = $region9
    $region8: #{tpu_custom_call.1} parent=1 // pred_region
      %40 = vsyncadd [#allocation6], 0
      %s41 = sshll.u32 %s1, 4
      %s42 = int_to_ptr.hbm [resolvable:$true] %s41
      %s43 = sshll.u32 [#allocation5], 4
      %s44 = int_to_ptr.vmem [resolvable:$true] %s43
      %49 = dma.hbm_to_vmem [thread:$0]  %s42, 2048, %s44, [#allocation6], 128, 128, 8
    $region9: #{tpu_custom_call.1} parent=1 // pred_fallthru
      _
    // Predicated region
    $region10: #{tpu_custom_call.1} parent=1 // pred_check
      _
    $region11: #{tpu_custom_call.1} parent=1 // pred_check_branch
      %51 = sbr.rel (0) target = $region13
    $region12: #{tpu_custom_call.1} parent=1 // pred_region
      _
    $region13: #{tpu_custom_call.1} parent=1 // pred_fallthru
      _
    // Predicated region
    $region14: #{tpu_custom_call.1} parent=1 // pred_check
      _
    $region15: #{tpu_custom_call.1} parent=1 // pred_check_branch
      %53 = sbr.rel (0) target = $region17
    $region16: #{tpu_custom_call.1} parent=1 // pred_region
      %55 = vsyncadd [#allocation6], 0
      %s56 = sshll.u32 %s3, 4
      %s57 = int_to_ptr.hbm [resolvable:$true] %s56
      %s58 = sshll.u32 [#allocation7], 4
      %s59 = int_to_ptr.vmem [resolvable:$true] %s58
      %64 = dma.hbm_to_vmem [thread:$0]  %s57, 2048, %s59, [#allocation6], 128, 128, 8
    $region17: #{tpu_custom_call.1} parent=1 // pred_fallthru
      _
    // Predicated region
    $region18: #{tpu_custom_call.1} parent=1 // pred_check
      _
    $region19: #{tpu_custom_call.1} parent=1 // pred_check_branch
      %66 = sbr.rel (0) target = $region21
    $region20: #{tpu_custom_call.1} parent=1 // pred_region
      _
    $region21: #{tpu_custom_call.1} parent=1 // pred_fallthru
      _
    // Predicated region
    $region22: #{tpu_custom_call.1} parent=1 // pred_check
      _
    $region23: #{tpu_custom_call.1} parent=1 // pred_check_branch
      %68 = sbr.rel (0) target = $region25
    $region24: #{tpu_custom_call.1} parent=1 // pred_region
      %70 = vsyncadd [#allocation9], 0
      %s71 = sshll.u32 %s5, 4
      %s72 = int_to_ptr.hbm [resolvable:$true] %s71
      %s73 = sshll.u32 [#allocation8], 4
      %s74 = int_to_ptr.vmem [resolvable:$true] %s73
      %79 = dma.hbm_to_vmem [thread:$0]  %s72, 2048, %s74, [#allocation9], 128, 128, 8
    $region25: #{tpu_custom_call.1} parent=1 // pred_fallthru
      _
    // Predicated region
    $region26: #{tpu_custom_call.1} parent=1 // pred_check
      _
    $region27: #{tpu_custom_call.1} parent=1 // pred_check_branch
      %81 = sbr.rel (0) target = $region29
    $region28: #{tpu_custom_call.1} parent=1 // pred_region
      _
    $region29: #{tpu_custom_call.1} parent=1 // pred_fallthru
      _
    // Predicated region
    $region30: #{tpu_custom_call.1} parent=1 // pred_check
      _
    $region31: #{tpu_custom_call.1} parent=1 // pred_check_branch
      %83 = sbr.rel (0) target = $region33
    $region32: #{tpu_custom_call.1} parent=1 // pred_region
      %85 = vsyncadd [#allocation9], 0
      %s86 = sshll.u32 %s7, 4
      %s87 = int_to_ptr.hbm [resolvable:$true] %s86
      %s88 = sshll.u32 [#allocation10], 4
      %s89 = int_to_ptr.vmem [resolvable:$true] %s88
      %94 = dma.hbm_to_vmem [thread:$0]  %s87, 2048, %s89, [#allocation9], 128, 128, 8
    $region33: #{tpu_custom_call.1} parent=1 // pred_fallthru
      _
    // Predicated region
    $region34: #{tpu_custom_call.1} parent=1 // pred_check
      _
    $region35: #{tpu_custom_call.1} parent=1 // pred_check_branch
      %96 = sbr.rel (0) target = $region37
    $region36: #{tpu_custom_call.1} parent=1 // pred_region
      _
    $region37: #{tpu_custom_call.1} parent=1 // pred_fallthru
      _
    // Predicated region
    $region38: #{tpu_custom_call.1} parent=1 // pred_check
      _
    $region39: #{tpu_custom_call.1} parent=1 // pred_check_branch
      %98 = sbr.rel (0) target = $region41
    $region40: #{tpu_custom_call.1} parent=1 // pred_region
      %100 = vsyncadd [#allocation12], 0
      %s101 = sshll.u32 %s9, 4
      %s102 = int_to_ptr.hbm [resolvable:$true] %s101
      %s103 = sshll.u32 [#allocation11], 4
      %s104 = int_to_ptr.vmem [resolvable:$true] %s103
      %109 = dma.hbm_to_vmem [thread:$0]  %s102, 2048, %s104, [#allocation12], 128, 128, 8
    $region41: #{tpu_custom_call.1} parent=1 // pred_fallthru
      _
    // Predicated region
    $region42: #{tpu_custom_call.1} parent=1 // pred_check
      _
    $region43: #{tpu_custom_call.1} parent=1 // pred_check_branch
      %111 = sbr.rel (0) target = $region45
    $region44: #{tpu_custom_call.1} parent=1 // pred_region
      _
    $region45: #{tpu_custom_call.1} parent=1 // pred_fallthru
      _
    // Predicated region
    $region46: #{tpu_custom_call.1} parent=1 // pred_check
      _
    $region47: #{tpu_custom_call.1} parent=1 // pred_check_branch
      %113 = sbr.rel (0) target = $region49
    $region48: #{tpu_custom_call.1} parent=1 // pred_region
      %115 = vsyncadd [#allocation12], 0
      %s116 = sshll.u32 %s11, 4
      %s117 = int_to_ptr.hbm [resolvable:$true] %s116
      %s118 = sshll.u32 [#allocation13], 4
      %s119 = int_to_ptr.vmem [resolvable:$true] %s118
      %124 = dma.hbm_to_vmem [thread:$0]  %s117, 2048, %s119, [#allocation12], 128, 128, 8
    $region49: #{tpu_custom_call.1} parent=1 // pred_fallthru
      _
    // Predicated region
    $region50: #{tpu_custom_call.1} parent=1 // pred_check
      _
    $region51: #{tpu_custom_call.1} parent=1 // pred_check_branch
      %126 = sbr.rel (0) target = $region53
    $region52: #{tpu_custom_call.1} parent=1 // pred_region
      _
    $region53: #{tpu_custom_call.1} parent=1 // pred_fallthru
      _
    // Predicated region
    $region54: #{tpu_custom_call.1} parent=1 // pred_check
      _
    $region55: #{tpu_custom_call.1} parent=1 // pred_check_branch
      %128 = sbr.rel (0) target = $region57
    $region56: #{tpu_custom_call.1} parent=1 // pred_region
      %130 = dma.done [#allocation3], 128
    $region57: #{tpu_custom_call.1} parent=1 // pred_fallthru
      _
    // Predicated region
    $region58: #{tpu_custom_call.1} parent=1 // pred_check
      _
    $region59: #{tpu_custom_call.1} parent=1 // pred_check_branch
      %132 = sbr.rel (0) target = $region61
    $region60: #{tpu_custom_call.1} parent=1 // pred_region
      %134 = dma.done [#allocation6], 2048
    $region61: #{tpu_custom_call.1} parent=1 // pred_fallthru
      _
    // Predicated region
    $region62: #{tpu_custom_call.1} parent=1 // pred_check
      _
    $region63: #{tpu_custom_call.1} parent=1 // pred_check_branch
      %136 = sbr.rel (0) target = $region65
    $region64: #{tpu_custom_call.1} parent=1 // pred_region
      %138 = dma.done [#allocation6], 2048
    $region65: #{tpu_custom_call.1} parent=1 // pred_fallthru
      _
    // Predicated region
    $region66: #{tpu_custom_call.1} parent=1 // pred_check
      _
    $region67: #{tpu_custom_call.1} parent=1 // pred_check_branch
      %140 = sbr.rel (0) target = $region69
    $region68: #{tpu_custom_call.1} parent=1 // pred_region
      %142 = dma.done [#allocation9], 2048
    $region69: #{tpu_custom_call.1} parent=1 // pred_fallthru
      _
    // Predicated region
    $region70: #{tpu_custom_call.1} parent=1 // pred_check
      _
    $region71: #{tpu_custom_call.1} parent=1 // pred_check_branch
      %144 = sbr.rel (0) target = $region73
    $region72: #{tpu_custom_call.1} parent=1 // pred_region
      %146 = dma.done [#allocation9], 2048
    $region73: #{tpu_custom_call.1} parent=1 // pred_fallthru
      _
    // Predicated region
    $region74: #{tpu_custom_call.1} parent=1 // pred_check
      _
    $region75: #{tpu_custom_call.1} parent=1 // pred_check_branch
      %148 = sbr.rel (0) target = $region77
    $region76: #{tpu_custom_call.1} parent=1 // pred_region
      %150 = dma.done [#allocation12], 2048
    $region77: #{tpu_custom_call.1} parent=1 // pred_fallthru
      _
    // Predicated region
    $region78: #{tpu_custom_call.1} parent=1 // pred_check
      _
    $region79: #{tpu_custom_call.1} parent=1 // pred_check_branch
      %152 = sbr.rel (0) target = $region81
    $region80: #{tpu_custom_call.1} parent=1 // pred_region
      %154 = dma.done [#allocation12], 2048
    $region81: #{tpu_custom_call.1} parent=1 // pred_fallthru
      _
    %v155 = vld [vmem:[#allocation2] sm:$0xff]
    %v156 = vld [vmem:[#allocation5] sm:$0xff]
    %v157 = vld [vmem:[#allocation5 + $0x8] sm:$0xff]
    %v158 = vld [vmem:[#allocation5 + $0x10] sm:$0xff]
    %v159 = vld [vmem:[#allocation5 + $0x18] sm:$0xff]
    %v160 = vld [vmem:[#allocation5 + $0x20] sm:$0xff]
    %v161 = vld [vmem:[#allocation5 + $0x28] sm:$0xff]
    %v162 = vld [vmem:[#allocation5 + $0x30] sm:$0xff]
    %v163 = vld [vmem:[#allocation5 + $0x38] sm:$0xff]
    %v164 = vld [vmem:[#allocation5 + $0x40] sm:$0xff]
    %v165 = vld [vmem:[#allocation5 + $0x48] sm:$0xff]
    %v166 = vld [vmem:[#allocation5 + $0x50] sm:$0xff]
    %v167 = vld [vmem:[#allocation5 + $0x58] sm:$0xff]
    %v168 = vld [vmem:[#allocation5 + $0x60] sm:$0xff]
    %v169 = vld [vmem:[#allocation5 + $0x68] sm:$0xff]
    %v170 = vld [vmem:[#allocation5 + $0x70] sm:$0xff]
    %v171 = vld [vmem:[#allocation5 + $0x78] sm:$0xff]
    %v172 = vld [vmem:[%s2] sm:$0x1]
    %v174 = vperm.slane %v172, 0
    %176 = vmatpush.msra.mxu0 %v171
    %177 = vmatpush.msra.mxu0 %v170
    %178 = vmatpush.msra.mxu0 %v169
    %179 = vmatpush.msra.mxu0 %v168
    %180 = vmatpush.msra.mxu0 %v167
    %181 = vmatpush.msra.mxu0 %v166
    %182 = vmatpush.msra.mxu0 %v165
    %183 = vmatpush.msra.mxu0 %v164
    %184 = vmatpush.msra.mxu0 %v163
    %185 = vmatpush.msra.mxu0 %v162
    %186 = vmatpush.msra.mxu0 %v161
    %187 = vmatpush.msra.mxu0 %v160
    %188 = vmatpush.msra.mxu0 %v159
    %189 = vmatpush.msra.mxu0 %v158
    %190 = vmatpush.msra.mxu0 %v157
    %191 = vmatpush.msra.mxu0 %v156
    %192 = vmatmul.f32.gmra.mxu0 %v155
    %v193 = vpop.f32.mrf.mxu0
    %v194 = vadd.f32 %v174, %v193
    %195 = vdwg.mxu0
    %v196 = vmax.f32 %v194, 0.0
    %v197 = vld [vmem:[#allocation7] sm:$0xff]
    %v198 = vld [vmem:[#allocation7 + $0x8] sm:$0xff]
    %v199 = vld [vmem:[#allocation7 + $0x10] sm:$0xff]
    %v200 = vld [vmem:[#allocation7 + $0x18] sm:$0xff]
    %v201 = vld [vmem:[#allocation7 + $0x20] sm:$0xff]
    %v202 = vld [vmem:[#allocation7 + $0x28] sm:$0xff]
    %v203 = vld [vmem:[#allocation7 + $0x30] sm:$0xff]
    %v204 = vld [vmem:[#allocation7 + $0x38] sm:$0xff]
    %v205 = vld [vmem:[#allocation7 + $0x40] sm:$0xff]
    %v206 = vld [vmem:[#allocation7 + $0x48] sm:$0xff]
    %v207 = vld [vmem:[#allocation7 + $0x50] sm:$0xff]
    %v208 = vld [vmem:[#allocation7 + $0x58] sm:$0xff]
    %v209 = vld [vmem:[#allocation7 + $0x60] sm:$0xff]
    %v210 = vld [vmem:[#allocation7 + $0x68] sm:$0xff]
    %v211 = vld [vmem:[#allocation7 + $0x70] sm:$0xff]
    %v212 = vld [vmem:[#allocation7 + $0x78] sm:$0xff]
    %v213 = vld [vmem:[%s4] sm:$0x1]
    %v215 = vperm.slane %v213, 0
    %217 = vmatpush.msra.mxu0 %v212
    %218 = vmatpush.msra.mxu0 %v211
    %219 = vmatpush.msra.mxu0 %v210
    %220 = vmatpush.msra.mxu0 %v209
    %221 = vmatpush.msra.mxu0 %v208
    %222 = vmatpush.msra.mxu0 %v207
    %223 = vmatpush.msra.mxu0 %v206
    %224 = vmatpush.msra.mxu0 %v205
    %225 = vmatpush.msra.mxu0 %v204
    %226 = vmatpush.msra.mxu0 %v203
    %227 = vmatpush.msra.mxu0 %v202
    %228 = vmatpush.msra.mxu0 %v201
    %229 = vmatpush.msra.mxu0 %v200
    %230 = vmatpush.msra.mxu0 %v199
    %231 = vmatpush.msra.mxu0 %v198
    %232 = vmatpush.msra.mxu0 %v197
    %233 = vmatmul.f32.gmra.mxu0 %v196
    %v234 = vpop.f32.mrf.mxu0
    %v235 = vadd.f32 %v215, %v234
    %236 = vdwg.mxu0
    %v237 = vmax.f32 %v235, 0.0
    %v238 = vld [vmem:[#allocation8] sm:$0xff]
    %v239 = vld [vmem:[#allocation8 + $0x8] sm:$0xff]
    %v240 = vld [vmem:[#allocation8 + $0x10] sm:$0xff]
    %v241 = vld [vmem:[#allocation8 + $0x18] sm:$0xff]
    %v242 = vld [vmem:[#allocation8 + $0x20] sm:$0xff]
    %v243 = vld [vmem:[#allocation8 + $0x28] sm:$0xff]
    %v244 = vld [vmem:[#allocation8 + $0x30] sm:$0xff]
    %v245 = vld [vmem:[#allocation8 + $0x38] sm:$0xff]
    %v246 = vld [vmem:[#allocation8 + $0x40] sm:$0xff]
    %v247 = vld [vmem:[#allocation8 + $0x48] sm:$0xff]
    %v248 = vld [vmem:[#allocation8 + $0x50] sm:$0xff]
    %v249 = vld [vmem:[#allocation8 + $0x58] sm:$0xff]
    %v250 = vld [vmem:[#allocation8 + $0x60] sm:$0xff]
    %v251 = vld [vmem:[#allocation8 + $0x68] sm:$0xff]
    %v252 = vld [vmem:[#allocation8 + $0x70] sm:$0xff]
    %v253 = vld [vmem:[#allocation8 + $0x78] sm:$0xff]
    %v254 = vld [vmem:[%s6] sm:$0x1]
    %v256 = vperm.slane %v254, 0
    %258 = vmatpush.msra.mxu0 %v253
    %259 = vmatpush.msra.mxu0 %v252
    %260 = vmatpush.msra.mxu0 %v251
    %261 = vmatpush.msra.mxu0 %v250
    %262 = vmatpush.msra.mxu0 %v249
    %263 = vmatpush.msra.mxu0 %v248
    %264 = vmatpush.msra.mxu0 %v247
    %265 = vmatpush.msra.mxu0 %v246
    %266 = vmatpush.msra.mxu0 %v245
    %267 = vmatpush.msra.mxu0 %v244
    %268 = vmatpush.msra.mxu0 %v243
    %269 = vmatpush.msra.mxu0 %v242
    %270 = vmatpush.msra.mxu0 %v241
    %271 = vmatpush.msra.mxu0 %v240
    %272 = vmatpush.msra.mxu0 %v239
    %273 = vmatpush.msra.mxu0 %v238
    %274 = vmatmul.f32.gmra.mxu0 %v237
    %v275 = vpop.f32.mrf.mxu0
    %v276 = vadd.f32 %v256, %v275
    %277 = vdwg.mxu0
    %v278 = vmax.f32 %v276, 0.0
    %v279 = vld [vmem:[#allocation10] sm:$0xff]
    %v280 = vld [vmem:[#allocation10 + $0x8] sm:$0xff]
    %v281 = vld [vmem:[#allocation10 + $0x10] sm:$0xff]
    %v282 = vld [vmem:[#allocation10 + $0x18] sm:$0xff]
    %v283 = vld [vmem:[#allocation10 + $0x20] sm:$0xff]
    %v284 = vld [vmem:[#allocation10 + $0x28] sm:$0xff]
    %v285 = vld [vmem:[#allocation10 + $0x30] sm:$0xff]
    %v286 = vld [vmem:[#allocation10 + $0x38] sm:$0xff]
    %v287 = vld [vmem:[#allocation10 + $0x40] sm:$0xff]
    %v288 = vld [vmem:[#allocation10 + $0x48] sm:$0xff]
    %v289 = vld [vmem:[#allocation10 + $0x50] sm:$0xff]
    %v290 = vld [vmem:[#allocation10 + $0x58] sm:$0xff]
    %v291 = vld [vmem:[#allocation10 + $0x60] sm:$0xff]
    %v292 = vld [vmem:[#allocation10 + $0x68] sm:$0xff]
    %v293 = vld [vmem:[#allocation10 + $0x70] sm:$0xff]
    %v294 = vld [vmem:[#allocation10 + $0x78] sm:$0xff]
    %v295 = vld [vmem:[%s8] sm:$0x1]
    %v297 = vperm.slane %v295, 0
    %299 = vmatpush.msra.mxu0 %v294
    %300 = vmatpush.msra.mxu0 %v293
    %301 = vmatpush.msra.mxu0 %v292
    %302 = vmatpush.msra.mxu0 %v291
    %303 = vmatpush.msra.mxu0 %v290
    %304 = vmatpush.msra.mxu0 %v289
    %305 = vmatpush.msra.mxu0 %v288
    %306 = vmatpush.msra.mxu0 %v287
    %307 = vmatpush.msra.mxu0 %v286
    %308 = vmatpush.msra.mxu0 %v285
    %309 = vmatpush.msra.mxu0 %v284
    %310 = vmatpush.msra.mxu0 %v283
    %311 = vmatpush.msra.mxu0 %v282
    %312 = vmatpush.msra.mxu0 %v281
    %313 = vmatpush.msra.mxu0 %v280
    %314 = vmatpush.msra.mxu0 %v279
    %315 = vmatmul.f32.gmra.mxu0 %v278
    %v316 = vpop.f32.mrf.mxu0
    %v317 = vadd.f32 %v297, %v316
    %318 = vdwg.mxu0
    %v319 = vmax.f32 %v317, 0.0
    %v320 = vld [vmem:[#allocation11] sm:$0xff]
    %v321 = vld [vmem:[#allocation11 + $0x8] sm:$0xff]
    %v322 = vld [vmem:[#allocation11 + $0x10] sm:$0xff]
    %v323 = vld [vmem:[#allocation11 + $0x18] sm:$0xff]
    %v324 = vld [vmem:[#allocation11 + $0x20] sm:$0xff]
    %v325 = vld [vmem:[#allocation11 + $0x28] sm:$0xff]
    %v326 = vld [vmem:[#allocation11 + $0x30] sm:$0xff]
    %v327 = vld [vmem:[#allocation11 + $0x38] sm:$0xff]
    %v328 = vld [vmem:[#allocation11 + $0x40] sm:$0xff]
    %v329 = vld [vmem:[#allocation11 + $0x48] sm:$0xff]
    %v330 = vld [vmem:[#allocation11 + $0x50] sm:$0xff]
    %v331 = vld [vmem:[#allocation11 + $0x58] sm:$0xff]
    %v332 = vld [vmem:[#allocation11 + $0x60] sm:$0xff]
    %v333 = vld [vmem:[#allocation11 + $0x68] sm:$0xff]
    %v334 = vld [vmem:[#allocation11 + $0x70] sm:$0xff]
    %v335 = vld [vmem:[#allocation11 + $0x78] sm:$0xff]
    %v336 = vld [vmem:[%s10] sm:$0x1]
    %v338 = vperm.slane %v336, 0
    %340 = vmatpush.msra.mxu0 %v335
    %341 = vmatpush.msra.mxu0 %v334
    %342 = vmatpush.msra.mxu0 %v333
    %343 = vmatpush.msra.mxu0 %v332
    %344 = vmatpush.msra.mxu0 %v331
    %345 = vmatpush.msra.mxu0 %v330
    %346 = vmatpush.msra.mxu0 %v329
    %347 = vmatpush.msra.mxu0 %v328
    %348 = vmatpush.msra.mxu0 %v327
    %349 = vmatpush.msra.mxu0 %v326
    %350 = vmatpush.msra.mxu0 %v325
    %351 = vmatpush.msra.mxu0 %v324
    %352 = vmatpush.msra.mxu0 %v323
    %353 = vmatpush.msra.mxu0 %v322
    %354 = vmatpush.msra.mxu0 %v321
    %355 = vmatpush.msra.mxu0 %v320
    %356 = vmatmul.f32.gmra.mxu0 %v319
    %v357 = vpop.f32.mrf.mxu0
    %v358 = vadd.f32 %v338, %v357
    %359 = vdwg.mxu0
    %v360 = vmax.f32 %v358, 0.0
    %v361 = vld [vmem:[#allocation13] sm:$0xff]
    %v362 = vld [vmem:[#allocation13 + $0x8] sm:$0xff]
    %v363 = vld [vmem:[#allocation13 + $0x10] sm:$0xff]
    %v364 = vld [vmem:[#allocation13 + $0x18] sm:$0xff]
    %v365 = vld [vmem:[#allocation13 + $0x20] sm:$0xff]
    %v366 = vld [vmem:[#allocation13 + $0x28] sm:$0xff]
    %v367 = vld [vmem:[#allocation13 + $0x30] sm:$0xff]
    %v368 = vld [vmem:[#allocation13 + $0x38] sm:$0xff]
    %v369 = vld [vmem:[#allocation13 + $0x40] sm:$0xff]
    %v370 = vld [vmem:[#allocation13 + $0x48] sm:$0xff]
    %v371 = vld [vmem:[#allocation13 + $0x50] sm:$0xff]
    %v372 = vld [vmem:[#allocation13 + $0x58] sm:$0xff]
    %v373 = vld [vmem:[#allocation13 + $0x60] sm:$0xff]
    %v374 = vld [vmem:[#allocation13 + $0x68] sm:$0xff]
    %v375 = vld [vmem:[#allocation13 + $0x70] sm:$0xff]
    %v376 = vld [vmem:[#allocation13 + $0x78] sm:$0xff]
    %v377 = vld [vmem:[%s12] sm:$0x1]
    %v379 = vperm.slane %v377, 0
    %381 = vmatpush.msra.mxu0 %v376
    %382 = vmatpush.msra.mxu0 %v375
    %383 = vmatpush.msra.mxu0 %v374
    %384 = vmatpush.msra.mxu0 %v373
    %385 = vmatpush.msra.mxu0 %v372
    %386 = vmatpush.msra.mxu0 %v371
    %387 = vmatpush.msra.mxu0 %v370
    %388 = vmatpush.msra.mxu0 %v369
    %389 = vmatpush.msra.mxu0 %v368
    %390 = vmatpush.msra.mxu0 %v367
    %391 = vmatpush.msra.mxu0 %v366
    %392 = vmatpush.msra.mxu0 %v365
    %393 = vmatpush.msra.mxu0 %v364
    %394 = vmatpush.msra.mxu0 %v363
    %395 = vmatpush.msra.mxu0 %v362
    %396 = vmatpush.msra.mxu0 %v361
    %397 = vmatmul.f32.gmra.mxu0 %v360
    %v398 = vpop.f32.mrf.mxu0
    %v399 = vadd.f32 %v379, %v398
    %400 = vdwg.mxu0
    %v401 = vxor.u32 %v399, 2147483648
    %v402 = vmul.f32 %v401, 1.442695
    %v403 = vpow.pop %v402
    %v404 = vadd.f32 %v403, 1.0
    %v405 = vrcp.pop %v404
    %v406 = vmul.f32 %v404, %v405
    %v407 = vsub.f32 1.0, %v406
    %v408 = vmul.f32 %v405, %v407
    %v409 = vadd.f32 %v405, %v408
    %vm410 = vweird.f32 %v404
    %vm411 = vweird.f32 %v405
    %vm412 = vmor %vm410, %vm411
    %v413 = vsel %vm412, %v405, %v409
    %v414 = vand.u32 2147483647, %v404
    %vm415 = vcmp.eq.f32.partialorder %v414, 8.507059e+37
    %v416 = vand.u32 %v404, 2147483648
    %v417 = vor.u32 1.1754944e-38, %v416
    %v418 = vsel %vm415, %v417, %v413
    %v419 = vmul.f32 1.0, %v418
    %420 = vst [vmem:[#allocation15] sm:$0xff] %v278
    %421 = vst [vmem:[#allocation14] sm:$0xff] %v419
    // Predicated region
    $region82: #{tpu_custom_call.1} parent=1 // pred_check
      _
    $region83: #{tpu_custom_call.1} parent=1 // pred_check_branch
      %423 = sbr.rel (0) target = $region85
    $region84: #{tpu_custom_call.1} parent=1 // pred_region
      %425 = vsyncadd [#allocation4], 0
      %s427 = sshll.u32 [#allocation14], 4
      %s428 = int_to_ptr.vmem [resolvable:$true] %s427
      %s429 = sshll.u32 %s13, 4
      %s430 = int_to_ptr.hbm [resolvable:$true] %s429
      %432 = dma.vmem_to_hbm [thread:$0]  %s428, 128, %s430, [#allocation4]
    $region85: #{tpu_custom_call.1} parent=1 // pred_fallthru
      _
    // Predicated region
    $region86: #{tpu_custom_call.1} parent=1 // pred_check
      _
    $region87: #{tpu_custom_call.1} parent=1 // pred_check_branch
      %434 = sbr.rel (0) target = $region89
    $region88: #{tpu_custom_call.1} parent=1 // pred_region
      %436 = vsyncadd [#allocation16], 0
      %s438 = sshll.u32 [#allocation15], 4
      %s439 = int_to_ptr.vmem [resolvable:$true] %s438
      %s440 = sshll.u32 %s14, 4
      %s441 = int_to_ptr.hbm [resolvable:$true] %s440
      %443 = dma.vmem_to_hbm [thread:$0]  %s439, 128, %s441, [#allocation16]
    $region89: #{tpu_custom_call.1} parent=1 // pred_fallthru
      _
    // Predicated region
    $region90: #{tpu_custom_call.1} parent=1 // pred_check
      _
    $region91: #{tpu_custom_call.1} parent=1 // pred_check_branch
      %445 = sbr.rel (0) target = $region93
    $region92: #{tpu_custom_call.1} parent=1 // pred_region
      %447 = dma.done [#allocation4], 128
    $region93: #{tpu_custom_call.1} parent=1 // pred_fallthru
      _
    // Predicated region
    $region94: #{tpu_custom_call.1} parent=1 // pred_check
      _
    $region95: #{tpu_custom_call.1} parent=1 // pred_check_branch
      %449 = sbr.rel (0) target = $region97
    $region96: #{tpu_custom_call.1} parent=1 // pred_region
      %451 = dma.done [#allocation16], 128
    $region97: #{tpu_custom_call.1} parent=1 // pred_fallthru
      _
    %452 = vsyncpa [#allocation3], 1
    %453 = vsyncpa [#allocation6], 1
    %454 = vsyncpa [#allocation9], 1
    %455 = vsyncpa [#allocation12], 1
    %456 = vsyncpa [#allocation4], 1
    %457 = vsyncpa [#allocation16], 1

</llo_original>
